<compile_context>
chip_gen: v6e
topology: v6e:2x2x1
jax: 0.10.0
libtpu: 0.0.40
codegen_flags: <defaults>
</compile_context>

<pallas_src>
import jax
import jax.numpy as jnp
from jax.experimental import pallas as pl
from jax.experimental.pallas import tpu as pltpu


def _map_reshape_kernel(x_ref, out_ref):
    # x_ref:  (1, TILE_Q, P)   patch-major view of the input map
    # out_ref:(1, 1, TILE_Q, N) one head's row-block of the attention map
    pm = jnp.max(x_ref[0], axis=-1, keepdims=True)            # (TILE_Q, 1) per-patch max
    tq, n = out_ref.shape[2], out_ref.shape[3]
    out_ref[...] = jnp.broadcast_to(pm[None, None], (1, 1, tq, n)).astype(out_ref.dtype)


def _choose_tile(n, cap=512):
    """Largest row tile <= cap that divides n and respects the (8,128) layout rules."""
    if n <= cap:
        return n
    for t in range(cap, 7, -1):
        if n % t == 0 and t % 8 == 0:
            return t
    return n  # fallback: single full-extent block (always layout-legal)


def map_reshape_forward(m, patch_size, num_heads):
    """m: (B, h*p1, w*p2) float map -> map_attn: (B, num_heads, N, N), N = h*w."""
    p1, p2 = patch_size
    B, H, W = m.shape
    assert H % p1 == 0 and W % p2 == 0, "spatial dims must be divisible by patch size"
    h, w = H // p1, W // p2
    N, P = h * w, p1 * p2

    # einops 'b (h p1) (w p2) -> b (h w) (p1 p2)': a pure view/permutation,
    # executed once by XLA in the wrapper (negligible vs. the N*N output writes).
    x = m.reshape(B, h, p1, w, p2).transpose(0, 1, 3, 2, 4).reshape(B, N, P)

    tile_q = _choose_tile(N)
    grid = (B, N // tile_q, num_heads)  # heads innermost: input block reused across heads

    return pl.pallas_call(
        _map_reshape_kernel,
        out_shape=jax.ShapeDtypeStruct((B, num_heads, N, N), m.dtype),
        grid=grid,
        in_specs=[
            pl.BlockSpec((1, tile_q, P), lambda b, q, hd: (b, q, 0)),   # patch block
        ],
        out_specs=pl.BlockSpec((1, 1, tile_q, N), lambda b, q, hd: (b, hd, q, 0)),
        compiler_params=pltpu.CompilerParams(
            dimension_semantics=("parallel", "parallel", "parallel")),
    )(x)


def _reference(m, patch_size, num_heads):
    """Pure-JAX reference matching the PyTorch module exactly."""
    p1, p2 = patch_size
    B, H, W = m.shape
    h, w = H // p1, W // p2
    N = h * w
    x = m.reshape(B, h, p1, w, p2).transpose(0, 1, 3, 2, 4).reshape(B, N, p1 * p2)
    pm = x.max(axis=-1)                                         # (B, N)
    return jnp.broadcast_to(pm[:, None, :, None], (B, num_heads, N, N)).astype(m.dtype)


if __name__ == "__main__":
    # Small deterministic configuration consistent with the module:
    # batch=2, 16x16 map, 2x2 patches -> N = 64 tokens, 4 heads.
    B = 2
    patch_size = (2, 2)
    num_heads = 4
    H = W = 16

    key = jax.random.PRNGKey(0)
    m = jax.random.normal(key, (B, H, W), dtype=jnp.float32)

    out = map_reshape_forward(m, patch_size, num_heads)
    out = jax.block_until_ready(out)

    N = (H // patch_size[0]) * (W // patch_size[1])
    ref = _reference(m, patch_size, num_heads)
    assert out.shape == (B, num_heads, N, N)
    assert jnp.allclose(out, ref)

    print("KERNEL_OK")
</pallas_src>

<mosaic_0001>
module attributes {stable_mosaic.version = 11 : i64} {
  func.func @_map_reshape_kernel(%arg0: i32, %arg1: i32, %arg2: i32, %arg3: memref<1x64x4xf32, #tpu.memory_space<vmem>>, %arg4: memref<1x1x64x64xf32, #tpu.memory_space<vmem>>) attributes {dimension_semantics = [#tpu.dimension_semantics<parallel>, #tpu.dimension_semantics<parallel>, #tpu.dimension_semantics<parallel>], iteration_bounds = array<i64: 2, 1, 4>, scalar_prefetch = 0 : i64, scratch_operands = 0 : i64, tpu.core_type = #tpu.core_type<tc>, window_params = [{transform_indices = @transform_0, window_bounds = array<i64: 1, 64, 4>}, {transform_indices = @transform_1, window_bounds = array<i64: 1, 1, 64, 64>}]} {
    %c0 = arith.constant 0 : index
    %c0_0 = arith.constant 0 : index
    %c0_1 = arith.constant 0 : index
    %0 = vector.load %arg3[%c0, %c0_0, %c0_1] : memref<1x64x4xf32, #tpu.memory_space<vmem>>, vector<1x64x4xf32>
    %1 = vector.shape_cast %0 : vector<1x64x4xf32> to vector<64x4xf32>
    %cst = arith.constant dense<0xFF800000> : vector<64xf32>
    %2 = vector.multi_reduction <maximumf>, %1, %cst [1] : vector<64x4xf32> to vector<64xf32>
    %3 = vector.shape_cast %2 : vector<64xf32> to vector<64x1xf32>
    %4 = vector.shape_cast %3 : vector<64x1xf32> to vector<1x1x64x1xf32>
    %5 = vector.shape_cast %4 : vector<1x1x64x1xf32> to vector<1x1x64x1xf32>
    %6 = vector.broadcast %5 : vector<1x1x64x1xf32> to vector<1x1x64x64xf32>
    %c0_2 = arith.constant 0 : index
    %c0_3 = arith.constant 0 : index
    %c0_4 = arith.constant 0 : index
    %c0_5 = arith.constant 0 : index
    %7 = vector.load %arg4[%c0_2, %c0_3, %c0_4, %c0_5] : memref<1x1x64x64xf32, #tpu.memory_space<vmem>>, vector<1x1x64x64xf32>
    tpu.vector_store %arg4[%c0_2, %c0_3, %c0_4, %c0_5], %6 {strides = array<i32>} : memref<1x1x64x64xf32, #tpu.memory_space<vmem>>, vector<1x1x64x64xf32>,
    return
  }
  func.func @transform_0(%arg0: i32, %arg1: i32, %arg2: i32) -> (i32, i32, i32) {
    %c0_i32 = arith.constant 0 : i32
    %c0_i32_0 = arith.constant 0 : i32
    return %arg0, %arg1, %c0_i32 : i32, i32, i32
  }
  func.func @transform_1(%arg0: i32, %arg1: i32, %arg2: i32) -> (i32, i32, i32, i32) {
    %c0_i32 = arith.constant 0 : i32
    %c0_i32_0 = arith.constant 0 : i32
    return %arg0, %arg2, %arg1, %c0_i32 : i32, i32, i32, i32
  }
}

</mosaic_0001>

<llo_original>
// kernel: tpu_custom_call.1
$region0: #{tpu_custom_call.1}
  #allocation0 [shape = 'u32[]', space=smem, size = 0x4, offset = 0x4, fixed_abs, tag = 'smem constant byte address 0x4 - core index']
  #allocation1 [shape = 'u32[144,128]{1,0:T(1,128)}', space=vmem, size = 0x12000, scoped, tag = 'internal scratch']
  %s0 = inlined_call_operand.vmem [shape: f32[2,64,4], index: 0, kind: input, shape index: {}]
  %s1 = inlined_call_operand.hbm [shape: f32[2,4,64,64], index: 1, kind: output, shape index: {}]
  %s2 = sld [smem:[#allocation0]]
  $region37: #{tpu_custom_call.1} parent=0
    _
  %s4 = ssub.s32 1, %s2
  %s5 = scalar_select 0, %s4, %s2
  $region1: #{tpu_custom_call.1} parent=0
    #allocation2 [shape = 'u8[65536]{0}', space=vmem, size = 0x10000, scoped, tag = 'output window, operand 0']
    #allocation3 [shape = 's32[2]{0}', space=sflag, size = 0x8, scoped, tag = 'scoped memory for tpu_custom_call.1']
    %6 = vsyncpa [#allocation3], 0
    %s7 = scalar_lea.sflag [#allocation3], 1
    %8 = vsyncpa %s7, 0
    loop: start=0, step=1, limit=10
    $region2: #{tpu_custom_call.1} parent=1 // loop_pre_header
      _
    $region3: #{tpu_custom_call.1} parent=1 // loop_header
      %s10 = sphi 0, %s14
      %p11 = scmp.ge.s32.totalorder %s10, 10
      %s17 = sphi 0, %s36
      %s18 = sphi 0, %s32
      %s19 = sphi 0, %s28
      %s20 = sphi 0, %s17
      %s21 = sphi 0, %s18
      %s22 = sphi 0, %s19
      %s23 = sphi 0, %s20
      %s24 = sphi 0, %s21
      %s25 = sphi 0, %s22
      %s41 = sphi 0, %s43
      %s44 = sphi 0, %s41
      %s45 = sphi 0, %s44
      %s61 = sphi 0, %s45
      %s71 = sphi 0, %s73
      %s74 = sphi 0, %s71
      %s75 = sphi 0, %s74
      %s91 = sphi 0, %s75
    $region4: #{tpu_custom_call.1} parent=1 // loop_header_branch
      %13 = sbr.rel (%p11) target = $region8
    $region5: #{tpu_custom_call.1} parent=1 // loop_body
      %s15 = ssub.s32 %s10, 1
      %s16 = ssub.s32 %s10, 2
      %s26 = sadd.s32 1, %s19
      %p27 = scmp.ge.s32.totalorder %s26, 4
      %s28 = scalar_select %p27, 0, %s26
      %s29 = sadd.s32 1, %s18
      %s30 = scalar_select %p27, %s29, %s18
      %p31 = scmp.ge.s32.totalorder %s30, 1
      %s32 = scalar_select %p31, 0, %s30
      %s33 = sadd.s32 1, %s17
      %s34 = scalar_select %p31, %s33, %s17
      %p35 = scmp.ge.s32.totalorder %s34, 2
      %s36 = scalar_select %p35, 0, %s34
      %s37 = ssub.s32 %s17, %s36
      %s38 = ssub.s32 %s18, %s32
      %s39 = sor.u32 %s37, %s38
      %p40 = scmp.eq.s32.totalorder %s39, 0
      %s42 = sadd.s32 %s41, 1
      %s43 = scalar_select %p40, %s41, %s42
      %p46 = pneg %p40
      %p47 = scmp.eq.s32.totalorder %s10, 7
      %p48 = por %p46, %p47
      %p49 = scmp.ne.s32.totalorder %s41, %s44
      %p50 = scmp.eq.s32.totalorder %s10, 0
      %p51 = por %p49, %p50
      %p52 = scmp.ne.s32.totalorder %s41, %s44
      %p53 = scmp.eq.s32.totalorder %s15, 7
      %p54 = por %p52, %p53
      %p55 = scmp.ne.s32.totalorder %s44, %s45
      %p56 = scmp.eq.s32.totalorder %s15, 0
      %p57 = por %p55, %p56
      %p58 = scmp.ne.s32.totalorder %s44, %s45
      %p59 = scmp.eq.s32.totalorder %s16, 7
      %p60 = por %p58, %p59
      %p62 = scmp.ne.s32.totalorder %s45, %s61
      %p63 = scmp.eq.s32.totalorder %s16, 0
      %p64 = por %p62, %p63
      %s65 = ssub.s32 %s17, %s36
      %s66 = ssub.s32 %s19, %s28
      %s67 = sor.u32 %s65, %s66
      %s68 = ssub.s32 %s18, %s32
      %s69 = sor.u32 %s67, %s68
      %p70 = scmp.eq.s32.totalorder %s69, 0
      %s72 = sadd.s32 %s71, 1
      %s73 = scalar_select %p70, %s71, %s72
      %p76 = pneg %p70
      %p77 = scmp.eq.s32.totalorder %s10, 7
      %p78 = por %p76, %p77
      %p79 = scmp.ne.s32.totalorder %s71, %s74
      %p80 = scmp.eq.s32.totalorder %s10, 0
      %p81 = por %p79, %p80
      %p82 = scmp.ne.s32.totalorder %s71, %s74
      %p83 = scmp.eq.s32.totalorder %s15, 7
      %p84 = por %p82, %p83
      %p85 = scmp.ne.s32.totalorder %s74, %s75
      %p86 = scmp.eq.s32.totalorder %s15, 0
      %p87 = por %p85, %p86
      %p88 = scmp.ne.s32.totalorder %s74, %s75
      %p89 = scmp.eq.s32.totalorder %s16, 7
      %p90 = por %p88, %p89
      %p92 = scmp.ne.s32.totalorder %s75, %s91
      %p93 = scmp.eq.s32.totalorder %s16, 0
      %p94 = por %p92, %p93
      %p95 = scmp.le.s32.totalorder 1, %s10
      %p96 = scmp.lt.s32.totalorder %s10, 9
      %p97 = pnand %p95, %p96
      %p98 = pneg %p97
      // Predicated region
      $region9: #{tpu_custom_call.1} parent=5 // pred_check
        _
      $region10: #{tpu_custom_call.1} parent=5 // pred_check_branch
        %100 = sbr.rel (%p97) target = $region12
      $region11: #{tpu_custom_call.1} parent=5 // pred_region
        %s101 = ssub.s32 %s10, 1
      $region12: #{tpu_custom_call.1} parent=5 // pred_fallthru
        _
      %p102 = scmp.lt.s32.totalorder %s10, 8
      // Predicated region
      $region13: #{tpu_custom_call.1} parent=5 // pred_check
        %p103 = pneg %p102
      $region14: #{tpu_custom_call.1} parent=5 // pred_check_branch
        %105 = sbr.rel (%p103) target = $region16
      $region15: #{tpu_custom_call.1} parent=5 // pred_region
        // Predicated region
        $region17: #{tpu_custom_call.1} parent=15 // pred_check
          %p106 = pneg %p51
        $region18: #{tpu_custom_call.1} parent=15 // pred_check_branch
          %108 = sbr.rel (%p106) target = $region20
        $region19: #{tpu_custom_call.1} parent=15 // pred_region
          %s109 = smul.u32 8, %s18
          %p110 = scmp.lt.s32.totalorder %s17, 1
          %s111 = scalar_select %p110, %s17, 1
          %p112 = scmp.lt.s32.totalorder %s109, 7
          %s113 = scalar_select %p112, %s109, 7
          %s114 = smul.addr %s111, 8
          %s115 = sadd.s32 %s113, %s114
          %s116 = smul.addr %s115, 8
          %s117 = scalar_lea.vmem %s0, %s116
          %s118 = smul.u32 8, %s18
        $region20: #{tpu_custom_call.1} parent=15 // pred_fallthru
          _
      $region16: #{tpu_custom_call.1} parent=5 // pred_fallthru
        _
      %p119 = scmp.le.s32.totalorder 1, %s10
      %p120 = scmp.lt.s32.totalorder %s10, 9
      %p121 = pnand %p119, %p120
      %p122 = pneg %p121
      // Predicated region
      $region21: #{tpu_custom_call.1} parent=5 // pred_check
        _
      $region22: #{tpu_custom_call.1} parent=5 // pred_check_branch
        %124 = sbr.rel (%p121) target = $region24
      $region23: #{tpu_custom_call.1} parent=5 // pred_region
        %s125 = ssub.s32 %s10, 1
        %s126 = smul.u32 8, %s21
        %p127 = scmp.lt.s32.totalorder %s20, 1
        %s128 = scalar_select %p127, %s20, 1
        %p129 = scmp.lt.s32.totalorder %s126, 7
        %s130 = scalar_select %p129, %s126, 7
        %s131 = smul.addr %s128, 8
        %s132 = sadd.s32 %s130, %s131
        %s133 = smul.addr %s132, 8
        %s134 = scalar_lea.vmem %s0, %s133
        %p135 = pneg %p57
        %p136 = pneg %p54
        %p137 = pneg %p87
        %p138 = pneg %p84
        %s139 = sand.u32 %s74, 1
        %s140 = scalar_lea.sflag [#allocation3], %s139
        %s141 = sand.u32 %s74, 1
        %s142 = smul.addr %s141, 64
        %s143 = scalar_lea.vmem [#allocation2], %s142
        %s144 = smul.u32 8, %s21
        %p145 = scmp.lt.s32.totalorder %s20, 1
        %s146 = scalar_select %p145, %s20, 1
        %p147 = scmp.lt.s32.totalorder %s144, 7
        %s148 = scalar_select %p147, %s144, 7
        %s149 = smul.addr %s146, 8
        %s150 = sadd.s32 %s148, %s149
        %s151 = smul.addr %s150, 8
        %s152 = scalar_lea.vmem %s0, %s151
        %s153 = smul.u32 8, %s21
        %s154 = smul.u32 8, %s21
        %v155 = vld [vmem:[%s152] sm:$0xff]
        %v156 = vld [vmem:[%s152 + $0x8] sm:$0xff]
        %v157 = vld [vmem:[%s152 + $0x10] sm:$0xff]
        %v158 = vld [vmem:[%s152 + $0x18] sm:$0xff]
        %v159 = vld [vmem:[%s152 + $0x20] sm:$0xff]
        %v160 = vld [vmem:[%s152 + $0x28] sm:$0xff]
        %v161 = vld [vmem:[%s152 + $0x30] sm:$0xff]
        %v162 = vld [vmem:[%s152 + $0x38] sm:$0xff]
        %vm163 = vcmask 31744
        %v164 = vsel %vm163, %v155, -inf
        %165 = vmax.xlane.f32.xlu0 %v164
        %v166 = vpop.xlane.xlu0 %165
        %v167 = vsel %vm163, %v156, -inf
        %168 = vmax.xlane.f32.xlu0 %v167
        %v169 = vpop.xlane.xlu0 %168
        %v170 = vsel %vm163, %v157, -inf
        %171 = vmax.xlane.f32.xlu0 %v170
        %v172 = vpop.xlane.xlu0 %171
        %v173 = vsel %vm163, %v158, -inf
        %174 = vmax.xlane.f32.xlu0 %v173
        %v175 = vpop.xlane.xlu0 %174
        %v176 = vsel %vm163, %v159, -inf
        %177 = vmax.xlane.f32.xlu0 %v176
        %v178 = vpop.xlane.xlu0 %177
        %v179 = vsel %vm163, %v160, -inf
        %180 = vmax.xlane.f32.xlu0 %v179
        %v181 = vpop.xlane.xlu0 %180
        %v182 = vsel %vm163, %v161, -inf
        %183 = vmax.xlane.f32.xlu0 %v182
        %v184 = vpop.xlane.xlu0 %183
        %v185 = vsel %vm163, %v162, -inf
        %186 = vmax.xlane.f32.xlu0 %v185
        %v187 = vpop.xlane.xlu0 %186
        %vm188 = vcmask 523264
        %189 = vst.msk [vmem:[%s143] sm:$0xff] %vm188, %v166
        %190 = vst.msk [vmem:[%s143 + $0x8] sm:$0xff] %vm188, %v169
        %191 = vst.msk [vmem:[%s143 + $0x10] sm:$0xff] %vm188, %v172
        %192 = vst.msk [vmem:[%s143 + $0x18] sm:$0xff] %vm188, %v175
        %193 = vst.msk [vmem:[%s143 + $0x20] sm:$0xff] %vm188, %v178
        %194 = vst.msk [vmem:[%s143 + $0x28] sm:$0xff] %vm188, %v181
        %195 = vst.msk [vmem:[%s143 + $0x30] sm:$0xff] %vm188, %v184
        %196 = vst.msk [vmem:[%s143 + $0x38] sm:$0xff] %vm188, %v187
        %s197 = sand.u32 %s74, 1
        %s198 = scalar_lea.sflag [#allocation3], %s197
        %s199 = sand.u32 %s74, 1
        %s200 = smul.addr %s199, 64
        %s201 = scalar_lea.vmem [#allocation2], %s200
        // Predicated region
        $region25: #{tpu_custom_call.1} parent=23 // pred_check
          %p202 = pneg %p84
        $region26: #{tpu_custom_call.1} parent=23 // pred_check_branch
          %204 = sbr.rel (%p202) target = $region28
        $region27: #{tpu_custom_call.1} parent=23 // pred_region
          %s205 = smul.u32 8, %s21
          %s207 = ssub.s32 1024, 1024
          %208 = vsyncadd %s198, %s207
          %s209 = smul.addr %s22, 8
          %s210 = sadd.s32 %s205, %s209
          %s211 = smul.addr %s20, 32
          %s212 = sadd.s32 %s210, %s211
          %s213 = smul.addr %s212, 128
          %s214 = scalar_lea.hbm %s1, %s213
          %s215 = sshll.u32 %s201, 4
          %s216 = int_to_ptr.vmem [resolvable:$true] %s215
          %221 = dma.vmem_to_hbm [thread:$0]  %s216, 1024, %s214, %s198, 128, 128, 8
        $region28: #{tpu_custom_call.1} parent=23 // pred_fallthru
          _
      $region24: #{tpu_custom_call.1} parent=5 // pred_fallthru
        _
      %p222 = scmp.le.s32.totalorder 2, %s10
      // Predicated region
      $region29: #{tpu_custom_call.1} parent=5 // pred_check
        %p223 = pneg %p222
      $region30: #{tpu_custom_call.1} parent=5 // pred_check_branch
        %225 = sbr.rel (%p223) target = $region32
      $region31: #{tpu_custom_call.1} parent=5 // pred_region
        %s226 = ssub.s32 %s10, 2
        // Predicated region
        $region33: #{tpu_custom_call.1} parent=31 // pred_check
          %p227 = pneg %p90
        $region34: #{tpu_custom_call.1} parent=31 // pred_check_branch
          %229 = sbr.rel (%p227) target = $region36
        $region35: #{tpu_custom_call.1} parent=31 // pred_region
          %s230 = sand.u32 %s75, 1
          %s231 = scalar_lea.sflag [#allocation3], %s230
          %s232 = sand.u32 %s75, 1
          %s233 = smul.addr %s232, 64
          %s234 = scalar_lea.vmem [#allocation2], %s233
          %235 = dma.done %s231, 1024
        $region36: #{tpu_custom_call.1} parent=31 // pred_fallthru
          _
      $region32: #{tpu_custom_call.1} parent=5 // pred_fallthru
        _
    $region6: #{tpu_custom_call.1} parent=1 // loop_footer
      %s14 = sadd.s32 1, %s10
    $region7: #{tpu_custom_call.1} parent=1 // loop_footer_branch
      %9 = sbr.rel target = $region3
    $region8: #{tpu_custom_call.1} parent=1 // loop_exit
      _
    %236 = vsyncpa [#allocation3], 1
    %s237 = scalar_lea.sflag [#allocation3], 1
    %238 = vsyncpa %s237, 1

</llo_original>
